<compile_context>
chip_gen: v7x
topology: tpu7x:2x2x1
jax: 0.10.0
libtpu: 0.0.40
codegen_flags: <defaults>
</compile_context>

<pallas_src>
import functools

import jax
import jax.numpy as jnp
from jax.experimental import pallas as pl
from jax.experimental.pallas import tpu as pltpu


def decoder_kernel(z_ref, w1_ref, b1_ref, w2_ref, b2_ref, wo_ref, bo_ref, o_ref):
    """Fused 2-hidden-layer MLP decoder: (Linear+ReLU) x2 -> Linear.

    Matmul inputs are bf16 (MXU-native); accumulation is f32 via
    preferred_element_type; biases are f32 and added post-accumulation.
    Dropout is identity (eval mode).
    """
    z = z_ref[...]  # bf16 [block_b, z_dim]

    # hidden layer 1: Linear + ReLU  (Dropout = identity in eval)
    h1 = jnp.dot(z, w1_ref[...], preferred_element_type=jnp.float32) + b1_ref[...]
    h1 = jnp.maximum(h1, 0.0).astype(jnp.bfloat16)

    # hidden layer 2: Linear + ReLU
    h2 = jnp.dot(h1, w2_ref[...], preferred_element_type=jnp.float32) + b2_ref[...]
    h2 = jnp.maximum(h2, 0.0).astype(jnp.bfloat16)

    # output projection (no activation)
    out = jnp.dot(h2, wo_ref[...], preferred_element_type=jnp.float32) + bo_ref[...]
    o_ref[...] = out.astype(o_ref.dtype)


# Conservative tile cap: big enough to amortize per-grid-step overhead
# (~0.35 us), small enough that f32/bf16 spills don't saturate v5e's single
# vector-store slot. VMEM use is ~0.3 MiB double-buffered, a non-issue on all
# generations.
_MAX_BLOCK_B = 512


def _pick_block_b(B):
    """Default batch tile: single step for small B; >=2 steps (v7x 2 TCs)
    with a tile <= _MAX_BLOCK_B, multiple of 8, for large B."""
    if B <= _MAX_BLOCK_B:
        return B
    n_steps = max(2, pl.cdiv(B, _MAX_BLOCK_B))
    bb = pl.cdiv(B, n_steps)
    bb = ((bb + 7) // 8) * 8  # sublane (8) alignment
    return min(bb, _MAX_BLOCK_B)


def prepare_decoder_params(params):
    """Pre-cast params once into kernel dtypes (bf16 weights, f32 biases) so
    the per-call casts inside the jitted wrapper are no-ops."""
    return {
        "w1": params["w1"].astype(jnp.bfloat16),
        "b1": params["b1"].astype(jnp.float32),
        "w2": params["w2"].astype(jnp.bfloat16),
        "b2": params["b2"].astype(jnp.float32),
        "wo": params["wo"].astype(jnp.bfloat16),
        "bo": params["bo"].astype(jnp.float32),
    }


@functools.partial(jax.jit, static_argnames=("block_b", "out_dtype"))
def decoder_forward(z, params, *, block_b=None, out_dtype=jnp.float32):
    """Run the fused decoder kernel.

    z:       [B, z_dim] float (cast to bf16 for the MXU inside)
    params:  dict with w1 [z_dim,h1], b1 [1,h1], w2 [h1,h2], b2 [1,h2],
             wo [h2,out], bo [1,out]  (ideally pre-cast via
             prepare_decoder_params; casts below are no-ops in that case)
    out_dtype: jnp.float32 (module parity) or jnp.bfloat16 (halves the
             dominant output HBM writeback).
    """
    B, z_dim = z.shape
    h1 = params["w1"].shape[1]
    h2 = params["w2"].shape[1]
    out_dim = params["wo"].shape[1]

    if block_b is None:
        block_b = _pick_block_b(B)
    block_b = min(block_b, B)
    n_blocks = pl.cdiv(B, block_b)  # edge block (if any) is padded/masked by Pallas

    # No-op casts when params were prepared once with prepare_decoder_params.
    z_bf16 = z.astype(jnp.bfloat16)
    w1 = params["w1"].astype(jnp.bfloat16)
    w2 = params["w2"].astype(jnp.bfloat16)
    wo = params["wo"].astype(jnp.bfloat16)
    b1 = params["b1"].astype(jnp.float32)
    b2 = params["b2"].astype(jnp.float32)
    bo = params["bo"].astype(jnp.float32)

    # z / out tiled over batch; weights & biases broadcast (same block every
    # step, so they stay resident in VMEM across grid iterations).
    in_specs = [
        pl.BlockSpec((block_b, z_dim), lambda i: (i, 0)),
        pl.BlockSpec((z_dim, h1), lambda i: (0, 0)),
        pl.BlockSpec((1, h1), lambda i: (0, 0)),
        pl.BlockSpec((h1, h2), lambda i: (0, 0)),
        pl.BlockSpec((1, h2), lambda i: (0, 0)),
        pl.BlockSpec((h2, out_dim), lambda i: (0, 0)),
        pl.BlockSpec((1, out_dim), lambda i: (0, 0)),
    ]
    out_specs = pl.BlockSpec((block_b, out_dim), lambda i: (i, 0))

    out_itemsize = jnp.dtype(out_dtype).itemsize
    flops = 2 * B * (z_dim * h1 + h1 * h2 + h2 * out_dim)
    bytes_accessed = (
        B * z_dim * 2
        + (w1.size + w2.size + wo.size) * 2
        + (b1.size + b2.size + bo.size) * 4
        + B * out_dim * out_itemsize
    )

    return pl.pallas_call(
        decoder_kernel,
        out_shape=jax.ShapeDtypeStruct((B, out_dim), out_dtype),
        grid_spec=pltpu.PrefetchScalarGridSpec(
            num_scalar_prefetch=0,
            grid=(n_blocks,),
            in_specs=in_specs,
            out_specs=out_specs,
        ),
        compiler_params=pltpu.CompilerParams(
            dimension_semantics=("parallel",),
            vmem_limit_bytes=32 * 1024 * 1024,  # far above need; < physical on all gens
        ),
        cost_estimate=pl.CostEstimate(
            flops=flops, transcendentals=0, bytes_accessed=bytes_accessed
        ),
    )(z_bf16, w1, b1, w2, b2, wo, bo)


def init_decoder_params(key, z_dim, hidden_size, output_size):
    """Deterministic init matching the PyTorch module's shapes.

    hidden_size is a list; like the PyTorch code we reverse it:
      nodes = [z_dim, *reversed(hidden_size)]
    Weights stored as [in, out] (transposed vs. torch's [out, in]).
    """
    rev = list(reversed(hidden_size))
    nodes = [z_dim, *rev]
    keys = jax.random.split(key, 6)
    params = {}
    # hidden layer 1
    params["w1"] = jax.random.normal(keys[0], (nodes[0], nodes[1]), jnp.float32) * 0.1
    params["b1"] = jax.random.normal(keys[1], (1, nodes[1]), jnp.float32) * 0.1
    # hidden layer 2
    params["w2"] = jax.random.normal(keys[2], (nodes[1], nodes[2]), jnp.float32) * 0.1
    params["b2"] = jax.random.normal(keys[3], (1, nodes[2]), jnp.float32) * 0.1
    # output layer: Linear(hidden_size[-1] after reverse == nodes[-1], output_size)
    params["wo"] = jax.random.normal(keys[4], (nodes[2], output_size), jnp.float32) * 0.1
    params["bo"] = jax.random.normal(keys[5], (1, output_size), jnp.float32) * 0.1
    return params


def decoder_reference(z, params):
    """Pure-JAX reference with the same bf16-in / f32-accumulate numerics."""
    def dot_bf16(a, b):
        return jax.lax.dot(
            a.astype(jnp.bfloat16),
            b.astype(jnp.bfloat16),
            preferred_element_type=jnp.float32,
        )

    h = jnp.maximum(dot_bf16(z, params["w1"]) + params["b1"], 0.0)
    h = jnp.maximum(dot_bf16(h, params["w2"]) + params["b2"], 0.0)
    return dot_bf16(h, params["wo"]) + params["bo"]


def decoder_reference_f32(z, params):
    """Pure-f32 reference of the eval-mode forward pass."""
    h = jnp.maximum(z @ params["w1"] + params["b1"], 0.0)
    h = jnp.maximum(h @ params["w2"] + params["b2"], 0.0)
    return h @ params["wo"] + params["bo"]


if __name__ == "__main__":
    # Small shapes consistent with the module's forward:
    #   z: [batch, z_dim], hidden_size=[64, 32] (reversed -> [32, 64]),
    #   output_size=128.
    z_dim = 16
    hidden_size = [64, 32]
    output_size = 128

    key = jax.random.PRNGKey(0)
    k_z, k_p, k_z2 = jax.random.split(key, 3)
    raw_params = init_decoder_params(k_p, z_dim, hidden_size, output_size)
    params = prepare_decoder_params(raw_params)  # cast once, reuse every call

    # Case 1: tiny batch (single block, full-extent tile).
    B = 8
    z = jax.random.normal(k_z, (B, z_dim), jnp.float32)
    out = jax.block_until_ready(decoder_forward(z, params))
    assert out.shape == (B, output_size), out.shape
    assert out.dtype == jnp.float32, out.dtype
    ref = decoder_reference(z, raw_params)
    assert jnp.allclose(out, ref, atol=1e-2, rtol=1e-2), "mismatch vs bf16 reference"
    ref32 = decoder_reference_f32(z, raw_params)
    assert jnp.allclose(out, ref32, atol=5e-2, rtol=5e-2), "mismatch vs f32 reference"

    # Case 2: batch not divisible by the tile -> partial edge block handled by
    # Pallas (padded reads, masked writes); no wrapper pad/slice HBM copies.
    B2 = 300
    z2 = jax.random.normal(k_z2, (B2, z_dim), jnp.float32)
    out2 = jax.block_until_ready(decoder_forward(z2, params, block_b=128))  # grid=(3,)
    assert out2.shape == (B2, output_size), out2.shape
    ref2 = decoder_reference(z2, raw_params)
    assert jnp.allclose(out2, ref2, atol=1e-2, rtol=1e-2), "mismatch vs bf16 reference (tiled)"

    # Case 3: bf16 output path (halves the dominant output HBM writeback).
    out3 = jax.block_until_ready(
        decoder_forward(z2, params, block_b=128, out_dtype=jnp.bfloat16)
    )
    assert out3.dtype == jnp.bfloat16, out3.dtype
    assert jnp.allclose(out3.astype(jnp.float32), ref2, atol=5e-2, rtol=5e-2), (
        "mismatch vs bf16 reference (bf16 output)"
    )

    print("KERNEL_OK")
</pallas_src>

<mosaic_0001>
module attributes {stable_mosaic.version = 11 : i64} {
  func.func @decoder_kernel(%arg0: i32, %arg1: memref<8x16xbf16, #tpu.memory_space<vmem>>, %arg2: memref<16x32xbf16, #tpu.memory_space<vmem>>, %arg3: memref<1x32xf32, #tpu.memory_space<vmem>>, %arg4: memref<32x64xbf16, #tpu.memory_space<vmem>>, %arg5: memref<1x64xf32, #tpu.memory_space<vmem>>, %arg6: memref<64x128xbf16, #tpu.memory_space<vmem>>, %arg7: memref<1x128xf32, #tpu.memory_space<vmem>>, %arg8: memref<8x128xf32, #tpu.memory_space<vmem>>) attributes {dimension_semantics = [#tpu.dimension_semantics<parallel>], iteration_bounds = array<i64: 1>, scalar_prefetch = 0 : i64, scratch_operands = 0 : i64, tpu.core_type = #tpu.core_type<tc>, window_params = [{transform_indices = @transform_0, window_bounds = array<i64: 8, 16>}, {pipeline_mode = #tpu.pipeline_mode<synchronous>, transform_indices = @transform_1, window_bounds = array<i64: 16, 32>}, {pipeline_mode = #tpu.pipeline_mode<synchronous>, transform_indices = @transform_2, window_bounds = array<i64: 1, 32>}, {pipeline_mode = #tpu.pipeline_mode<synchronous>, transform_indices = @transform_3, window_bounds = array<i64: 32, 64>}, {pipeline_mode = #tpu.pipeline_mode<synchronous>, transform_indices = @transform_4, window_bounds = array<i64: 1, 64>}, {pipeline_mode = #tpu.pipeline_mode<synchronous>, transform_indices = @transform_5, window_bounds = array<i64: 64, 128>}, {pipeline_mode = #tpu.pipeline_mode<synchronous>, transform_indices = @transform_6, window_bounds = array<i64: 1, 128>}, {transform_indices = @transform_7, window_bounds = array<i64: 8, 128>}]} {
    %c0 = arith.constant 0 : index
    %c0_0 = arith.constant 0 : index
    %0 = vector.load %arg1[%c0, %c0_0] : memref<8x16xbf16, #tpu.memory_space<vmem>>, vector<8x16xbf16>
    %c0_1 = arith.constant 0 : index
    %c0_2 = arith.constant 0 : index
    %1 = vector.load %arg2[%c0_1, %c0_2] : memref<16x32xbf16, #tpu.memory_space<vmem>>, vector<16x32xbf16>
    %cst = arith.constant dense<0.000000e+00> : vector<8x32xf32>
    %2 = tpu.matmul %0, %1, %cst {dimension_numbers = #tpu.dot_dimension_numbers<[1], [0], [0], [1], [0, 0, 1, 1], [], []>} : vector<8x16xbf16>, vector<16x32xbf16>, vector<8x32xf32> -> vector<8x32xf32>
    %c0_3 = arith.constant 0 : index
    %c0_4 = arith.constant 0 : index
    %3 = vector.load %arg3[%c0_3, %c0_4] : memref<1x32xf32, #tpu.memory_space<vmem>>, vector<1x32xf32>
    %4 = vector.broadcast %3 : vector<1x32xf32> to vector<8x32xf32>
    %5 = arith.addf %2, %4 : vector<8x32xf32>
    %cst_5 = arith.constant 0.000000e+00 : f32
    %6 = vector.broadcast %cst_5 : f32 to vector<8x32xf32>
    %7 = arith.maximumf %5, %6 : vector<8x32xf32>
    %8 = arith.truncf %7 : vector<8x32xf32> to vector<8x32xbf16>
    %c0_6 = arith.constant 0 : index
    %c0_7 = arith.constant 0 : index
    %9 = vector.load %arg4[%c0_6, %c0_7] : memref<32x64xbf16, #tpu.memory_space<vmem>>, vector<32x64xbf16>
    %cst_8 = arith.constant dense<0.000000e+00> : vector<8x64xf32>
    %10 = tpu.matmul %8, %9, %cst_8 {dimension_numbers = #tpu.dot_dimension_numbers<[1], [0], [0], [1], [0, 0, 1, 1], [], []>} : vector<8x32xbf16>, vector<32x64xbf16>, vector<8x64xf32> -> vector<8x64xf32>
    %c0_9 = arith.constant 0 : index
    %c0_10 = arith.constant 0 : index
    %11 = vector.load %arg5[%c0_9, %c0_10] : memref<1x64xf32, #tpu.memory_space<vmem>>, vector<1x64xf32>
    %12 = vector.broadcast %11 : vector<1x64xf32> to vector<8x64xf32>
    %13 = arith.addf %10, %12 : vector<8x64xf32>
    %cst_11 = arith.constant 0.000000e+00 : f32
    %14 = vector.broadcast %cst_11 : f32 to vector<8x64xf32>
    %15 = arith.maximumf %13, %14 : vector<8x64xf32>
    %16 = arith.truncf %15 : vector<8x64xf32> to vector<8x64xbf16>
    %c0_12 = arith.constant 0 : index
    %c0_13 = arith.constant 0 : index
    %17 = vector.load %arg6[%c0_12, %c0_13] : memref<64x128xbf16, #tpu.memory_space<vmem>>, vector<64x128xbf16>
    %cst_14 = arith.constant dense<0.000000e+00> : vector<8x128xf32>
    %18 = tpu.matmul %16, %17, %cst_14 {dimension_numbers = #tpu.dot_dimension_numbers<[1], [0], [0], [1], [0, 0, 1, 1], [], []>} : vector<8x64xbf16>, vector<64x128xbf16>, vector<8x128xf32> -> vector<8x128xf32>
    %c0_15 = arith.constant 0 : index
    %c0_16 = arith.constant 0 : index
    %19 = vector.load %arg7[%c0_15, %c0_16] : memref<1x128xf32, #tpu.memory_space<vmem>>, vector<1x128xf32>
    %20 = vector.broadcast %19 : vector<1x128xf32> to vector<8x128xf32>
    %21 = arith.addf %18, %20 : vector<8x128xf32>
    %c0_17 = arith.constant 0 : index
    %c0_18 = arith.constant 0 : index
    %22 = vector.load %arg8[%c0_17, %c0_18] : memref<8x128xf32, #tpu.memory_space<vmem>>, vector<8x128xf32>
    tpu.vector_store %arg8[%c0_17, %c0_18], %21 {strides = array<i32>} : memref<8x128xf32, #tpu.memory_space<vmem>>, vector<8x128xf32>,
    return
  }
  func.func @transform_0(%arg0: i32) -> (i32, i32) {
    %c0_i32 = arith.constant 0 : i32
    %c0_i32_0 = arith.constant 0 : i32
    return %arg0, %c0_i32 : i32, i32
  }
  func.func @transform_1(%arg0: i32) -> (i32, i32) {
    %c0_i32 = arith.constant 0 : i32
    %c0_i32_0 = arith.constant 0 : i32
    %c0_i32_1 = arith.constant 0 : i32
    return %c0_i32, %c0_i32_0 : i32, i32
  }
  func.func @transform_2(%arg0: i32) -> (i32, i32) {
    %c0_i32 = arith.constant 0 : i32
    %c0_i32_0 = arith.constant 0 : i32
    %c0_i32_1 = arith.constant 0 : i32
    return %c0_i32, %c0_i32_0 : i32, i32
  }
  func.func @transform_3(%arg0: i32) -> (i32, i32) {
    %c0_i32 = arith.constant 0 : i32
    %c0_i32_0 = arith.constant 0 : i32
    %c0_i32_1 = arith.constant 0 : i32
    return %c0_i32, %c0_i32_0 : i32, i32
  }
  func.func @transform_4(%arg0: i32) -> (i32, i32) {
    %c0_i32 = arith.constant 0 : i32
    %c0_i32_0 = arith.constant 0 : i32
    %c0_i32_1 = arith.constant 0 : i32
    return %c0_i32, %c0_i32_0 : i32, i32
  }
  func.func @transform_5(%arg0: i32) -> (i32, i32) {
    %c0_i32 = arith.constant 0 : i32
    %c0_i32_0 = arith.constant 0 : i32
    %c0_i32_1 = arith.constant 0 : i32
    return %c0_i32, %c0_i32_0 : i32, i32
  }
  func.func @transform_6(%arg0: i32) -> (i32, i32) {
    %c0_i32 = arith.constant 0 : i32
    %c0_i32_0 = arith.constant 0 : i32
    %c0_i32_1 = arith.constant 0 : i32
    return %c0_i32, %c0_i32_0 : i32, i32
  }
  func.func @transform_7(%arg0: i32) -> (i32, i32) {
    %c0_i32 = arith.constant 0 : i32
    %c0_i32_0 = arith.constant 0 : i32
    return %arg0, %c0_i32 : i32, i32
  }
}

</mosaic_0001>

<llo_original>
// kernel: decoder_forward.1
$region0: #{decoder_forward.1}
  #allocation0 [shape = 'u32[]', space=smem, size = 0x4, offset = 0x4, fixed_abs, tag = 'smem constant byte address 0x4 - core index']
  #allocation1 [shape = 'u32[144,128]{1,0:T(1,128)}', space=vmem, size = 0x12000, scoped, tag = 'internal scratch']
  %s0 = inlined_call_operand.vmem [shape: bf16[8,16], index: 0, kind: input, shape index: {}]
  %s1 = inlined_call_operand.hbm [shape: bf16[16,32], index: 1, kind: input, shape index: {}]
  %s2 = inlined_call_operand.vmem [shape: f32[1,32], index: 2, kind: input, shape index: {}]
  %s3 = inlined_call_operand.hbm [shape: bf16[32,64], index: 3, kind: input, shape index: {}]
  %s4 = inlined_call_operand.vmem [shape: f32[1,64], index: 4, kind: input, shape index: {}]
  %s5 = inlined_call_operand.vmem [shape: bf16[64,128], index: 5, kind: input, shape index: {}]
  %s6 = inlined_call_operand.hbm [shape: f32[1,128], index: 6, kind: input, shape index: {}]
  %s7 = inlined_call_operand.hbm [shape: f32[8,128], index: 7, kind: output, shape index: {}]
  %s8 = sld [smem:[#allocation0]]
  $region50: #{decoder_forward.1} parent=0
    _
  %s10 = ssub.s32 1, %s8
  %s11 = scalar_select 0, %s10, %s8
  $region1: #{decoder_forward.1} parent=0
    #allocation2 [shape = 'u8[4096]{0}', space=vmem, size = 0x1000, scoped, tag = 'input window, operand 1, single buffered']
    #allocation3 [shape = 's32[1]{0}', space=sflag, size = 0x4, scoped, tag = 'scoped memory for decoder_forward.1']
    #allocation4 [shape = 's32[1]{0}', space=sflag, size = 0x4, scoped, tag = 'scoped memory for decoder_forward.1']
    #allocation5 [shape = 'u8[8192]{0}', space=vmem, size = 0x2000, scoped, tag = 'input window, operand 3, single buffered']
    #allocation6 [shape = 's32[1]{0}', space=sflag, size = 0x4, scoped, tag = 'scoped memory for decoder_forward.1']
    #allocation7 [shape = 'u8[512]{0}', space=vmem, size = 0x400, scoped, tag = 'input window, operand 6, single buffered']
    #allocation8 [shape = 'u8[4096]{0}', space=vmem, size = 0x1000, scoped, tag = 'output window, operand 0, single buffered']
    %12 = vsyncpa [#allocation3], 0
    %13 = vsyncpa [#allocation6], 0
    %14 = vsyncpa [#allocation4], 0
    // Predicated region
    $region2: #{decoder_forward.1} parent=1 // pred_check
      _
    $region3: #{decoder_forward.1} parent=1 // pred_check_branch
      %16 = sbr.rel (0) target = $region5
    $region4: #{decoder_forward.1} parent=1 // pred_region
      _
    $region5: #{decoder_forward.1} parent=1 // pred_fallthru
      _
    // Predicated region
    $region6: #{decoder_forward.1} parent=1 // pred_check
      _
    $region7: #{decoder_forward.1} parent=1 // pred_check_branch
      %18 = sbr.rel (0) target = $region9
    $region8: #{decoder_forward.1} parent=1 // pred_region
      %s20 = ssub.s32 128, 128
      %21 = vsyncadd [#allocation3], %s20
      %s22 = sshll.u32 [#allocation2], 4
      %s23 = int_to_ptr.vmem [resolvable:$true] %s22
      %28 = dma.hbm_to_vmem [thread:$0]  %s1, 128, %s23, [#allocation3], 64, 64, 4
    $region9: #{decoder_forward.1} parent=1 // pred_fallthru
      _
    // Predicated region
    $region10: #{decoder_forward.1} parent=1 // pred_check
      _
    $region11: #{decoder_forward.1} parent=1 // pred_check_branch
      %30 = sbr.rel (0) target = $region13
    $region12: #{decoder_forward.1} parent=1 // pred_region
      _
    $region13: #{decoder_forward.1} parent=1 // pred_fallthru
      _
    // Predicated region
    $region14: #{decoder_forward.1} parent=1 // pred_check
      _
    $region15: #{decoder_forward.1} parent=1 // pred_check_branch
      %32 = sbr.rel (0) target = $region17
    $region16: #{decoder_forward.1} parent=1 // pred_region
      %s34 = ssub.s32 256, 256
      %35 = vsyncadd [#allocation6], %s34
      %s36 = sshll.u32 [#allocation5], 4
      %s37 = int_to_ptr.vmem [resolvable:$true] %s36
      %42 = dma.hbm_to_vmem [thread:$0]  %s3, 256, %s37, [#allocation6], 64, 64, 4
    $region17: #{decoder_forward.1} parent=1 // pred_fallthru
      _
    // Predicated region
    $region18: #{decoder_forward.1} parent=1 // pred_check
      _
    $region19: #{decoder_forward.1} parent=1 // pred_check_branch
      %44 = sbr.rel (0) target = $region21
    $region20: #{decoder_forward.1} parent=1 // pred_region
      _
    $region21: #{decoder_forward.1} parent=1 // pred_fallthru
      _
    // Predicated region
    $region22: #{decoder_forward.1} parent=1 // pred_check
      _
    $region23: #{decoder_forward.1} parent=1 // pred_check_branch
      %46 = sbr.rel (0) target = $region25
    $region24: #{decoder_forward.1} parent=1 // pred_region
      _
    $region25: #{decoder_forward.1} parent=1 // pred_fallthru
      _
    // Predicated region
    $region26: #{decoder_forward.1} parent=1 // pred_check
      _
    $region27: #{decoder_forward.1} parent=1 // pred_check_branch
      %48 = sbr.rel (0) target = $region29
    $region28: #{decoder_forward.1} parent=1 // pred_region
      %s50 = ssub.s32 16, 16
      %51 = vsyncadd [#allocation6], %s50
      %s53 = sshll.u32 [#allocation7], 4
      %s54 = int_to_ptr.vmem [resolvable:$true] %s53
      %56 = dma.hbm_to_vmem [thread:$0]  %s6, 16, %s54, [#allocation6]
    $region29: #{decoder_forward.1} parent=1 // pred_fallthru
      _
    // Predicated region
    $region30: #{decoder_forward.1} parent=1 // pred_check
      _
    $region31: #{decoder_forward.1} parent=1 // pred_check_branch
      %58 = sbr.rel (0) target = $region33
    $region32: #{decoder_forward.1} parent=1 // pred_region
      %59 = dma.done [#allocation3], 128
    $region33: #{decoder_forward.1} parent=1 // pred_fallthru
      _
    // Predicated region
    $region34: #{decoder_forward.1} parent=1 // pred_check
      _
    $region35: #{decoder_forward.1} parent=1 // pred_check_branch
      %61 = sbr.rel (0) target = $region37
    $region36: #{decoder_forward.1} parent=1 // pred_region
      %62 = dma.done [#allocation6], 256
    $region37: #{decoder_forward.1} parent=1 // pred_fallthru
      _
    // Predicated region
    $region38: #{decoder_forward.1} parent=1 // pred_check
      _
    $region39: #{decoder_forward.1} parent=1 // pred_check_branch
      %64 = sbr.rel (0) target = $region41
    $region40: #{decoder_forward.1} parent=1 // pred_region
      %65 = dma.done [#allocation6], 16
    $region41: #{decoder_forward.1} parent=1 // pred_fallthru
      _
    %v67 = vld [vmem:[%s0] sm:$0xf]
    %v68 = vld [vmem:[#allocation2] sm:$0xf]
    %v69 = vld [vmem:[#allocation2 + $0x4] sm:$0xf]
    %v70 = vld [vmem:[%s2] sm:$0x1]
    %v72 = vlaneseq
    %v73 = vshrl.u32 %v72, 7
    %v74 = vsub.s32 0, %v73
    %v75 = vrot.slane %v70, %v74
    %v79 = vunpack.c.l.b16 %v68
    %v80 = vunpack.c.l.b16 %v69
    %v81 = vpack.c.b16 %v80, %v79
    %vm83 = vcmask 130048
    %v85 = vsel %vm83, %v67, 0
    %87 = vmatprep.subr.bf16.mxu0 0
    %88 = vmatpush1.bf16.msra.mxu0 %v81
    %89 = vmatprep.subr.bf16.mxu0 0
    %90 = vmatpush1.bf16.msra.mxu0 0
    %91 = vmatprep.subr.bf16.mxu0 0
    %92 = vmatpush1.bf16.msra.mxu0 0
    %93 = vmatprep.subr.bf16.mxu0 0
    %94 = vmatpush1.bf16.msra.mxu0 0
    %95 = vmatprep.subr.bf16.mxu0 0
    %96 = vmatpush1.bf16.msra.mxu0 0
    %97 = vmatprep.subr.bf16.mxu0 0
    %98 = vmatpush1.bf16.msra.mxu0 0
    %99 = vmatprep.subr.bf16.mxu0 0
    %100 = vmatpush1.bf16.msra.mxu0 0
    %101 = vmatprep.subr.bf16.mxu0 0
    %102 = vmatpush1.bf16.msra.mxu0 0
    %103 = vmatprep.subr.bf16.mxu0 0
    %104 = vmatpush1.bf16.msra.mxu0 0
    %105 = vmatprep.subr.bf16.mxu0 0
    %106 = vmatpush1.bf16.msra.mxu0 0
    %107 = vmatprep.subr.bf16.mxu0 0
    %108 = vmatpush1.bf16.msra.mxu0 0
    %109 = vmatprep.subr.bf16.mxu0 0
    %110 = vmatpush1.bf16.msra.mxu0 0
    %111 = vmatprep.subr.bf16.mxu0 0
    %112 = vmatpush1.bf16.msra.mxu0 0
    %113 = vmatprep.subr.bf16.mxu0 0
    %114 = vmatpush1.bf16.msra.mxu0 0
    %115 = vmatprep.subr.bf16.mxu0 0
    %116 = vmatpush1.bf16.msra.mxu0 0
    %117 = vmatprep.subr.bf16.mxu0 0
    %118 = vmatpush1.bf16.msra.mxu0 0
    %119 = vmatprep.mubr.bf16.mxu0 0
    %120 = vmatmul.mubr.bf16.gmra.mrb[0].mxu0 %v85
    %v121 = vpop.f32.mrb[0].mxu0
    %v122 = vadd.f32 %v75, %v121
    %v123 = vpop.f32.mrb[0].mxu0
    %v124 = vpop.f32.mrb[0].mxu0
    %v125 = vpop.f32.mrb[0].mxu0
    %126 = vdwg.mxu0
    %v127 = vmax.f32 %v122, 0.0
    %v128 = vpack.c.bf16 %v127, %v127
    %v129 = vld [vmem:[#allocation5] sm:$0xf]
    %v130 = vld [vmem:[#allocation5 + $0x4] sm:$0xf]
    %v131 = vld [vmem:[#allocation5 + $0x8] sm:$0xf]
    %v132 = vld [vmem:[#allocation5 + $0xc] sm:$0xf]
    %v133 = vld [vmem:[%s4] sm:$0x1]
    %v135 = vlaneseq
    %v136 = vshrl.u32 %v135, 7
    %v137 = vsub.s32 0, %v136
    %v138 = vrot.slane %v133, %v137
    %v144 = vunpack.c.l.b16 %v129
    %v145 = vunpack.c.l.b16 %v130
    %v146 = vunpack.c.l.b16 %v131
    %v147 = vunpack.c.l.b16 %v132
    %v148 = vpack.c.b16 %v145, %v144
    %v149 = vpack.c.b16 %v147, %v146
    %vm152 = vcmask 261120
    %v154 = vsel %vm152, %v128, 0
    %156 = vmatprep.subr.bf16.mxu0 0
    %157 = vmatpush1.bf16.msra.mxu0 %v148
    %158 = vmatprep.subr.bf16.mxu0 0
    %159 = vmatpush1.bf16.msra.mxu0 %v149
    %160 = vmatprep.subr.bf16.mxu0 0
    %161 = vmatpush1.bf16.msra.mxu0 0
    %162 = vmatprep.subr.bf16.mxu0 0
    %163 = vmatpush1.bf16.msra.mxu0 0
    %164 = vmatprep.subr.bf16.mxu0 0
    %165 = vmatpush1.bf16.msra.mxu0 0
    %166 = vmatprep.subr.bf16.mxu0 0
    %167 = vmatpush1.bf16.msra.mxu0 0
    %168 = vmatprep.subr.bf16.mxu0 0
    %169 = vmatpush1.bf16.msra.mxu0 0
    %170 = vmatprep.subr.bf16.mxu0 0
    %171 = vmatpush1.bf16.msra.mxu0 0
    %172 = vmatprep.subr.bf16.mxu0 0
    %173 = vmatpush1.bf16.msra.mxu0 0
    %174 = vmatprep.subr.bf16.mxu0 0
    %175 = vmatpush1.bf16.msra.mxu0 0
    %176 = vmatprep.subr.bf16.mxu0 0
    %177 = vmatpush1.bf16.msra.mxu0 0
    %178 = vmatprep.subr.bf16.mxu0 0
    %179 = vmatpush1.bf16.msra.mxu0 0
    %180 = vmatprep.subr.bf16.mxu0 0
    %181 = vmatpush1.bf16.msra.mxu0 0
    %182 = vmatprep.subr.bf16.mxu0 0
    %183 = vmatpush1.bf16.msra.mxu0 0
    %184 = vmatprep.subr.bf16.mxu0 0
    %185 = vmatpush1.bf16.msra.mxu0 0
    %186 = vmatprep.subr.bf16.mxu0 0
    %187 = vmatpush1.bf16.msra.mxu0 0
    %188 = vmatprep.mubr.bf16.mxu0 0
    %189 = vmatmul.mubr.bf16.gmra.mrb[0].mxu0 %v154
    %v190 = vpop.f32.mrb[0].mxu0
    %v191 = vadd.f32 %v138, %v190
    %v192 = vpop.f32.mrb[0].mxu0
    %v193 = vpop.f32.mrb[0].mxu0
    %v194 = vpop.f32.mrb[0].mxu0
    %195 = vdwg.mxu0
    %v196 = vmax.f32 %v191, 0.0
    %v197 = vpack.c.bf16 %v196, %v196
    %v198 = vld [vmem:[%s5] sm:$0xf]
    %v199 = vld [vmem:[%s5 + $0x4] sm:$0xf]
    %v200 = vld [vmem:[%s5 + $0x8] sm:$0xf]
    %v201 = vld [vmem:[%s5 + $0xc] sm:$0xf]
    %v202 = vld [vmem:[%s5 + $0x10] sm:$0xf]
    %v203 = vld [vmem:[%s5 + $0x14] sm:$0xf]
    %v204 = vld [vmem:[%s5 + $0x18] sm:$0xf]
    %v205 = vld [vmem:[%s5 + $0x1c] sm:$0xf]
    %v206 = vld [vmem:[#allocation7] sm:$0x1]
    %v208 = vlaneseq
    %v209 = vshrl.u32 %v208, 7
    %v210 = vsub.s32 0, %v209
    %v211 = vrot.slane %v206, %v210
    %v221 = vunpack.c.l.b16 %v198
    %v222 = vunpack.c.l.b16 %v199
    %v223 = vunpack.c.l.b16 %v200
    %v224 = vunpack.c.l.b16 %v201
    %v225 = vunpack.c.l.b16 %v202
    %v226 = vunpack.c.l.b16 %v203
    %v227 = vunpack.c.l.b16 %v204
    %v228 = vunpack.c.l.b16 %v205
    %v229 = vpack.c.b16 %v222, %v221
    %v230 = vpack.c.b16 %v224, %v223
    %v231 = vpack.c.b16 %v226, %v225
    %v232 = vpack.c.b16 %v228, %v227
    %vm237 = vcmask 523264
    %v239 = vsel %vm237, %v197, 0
    %241 = vmatprep.subr.bf16.mxu0 0
    %242 = vmatpush1.bf16.msra.mxu0 %v229
    %243 = vmatprep.subr.bf16.mxu0 0
    %244 = vmatpush1.bf16.msra.mxu0 %v230
    %245 = vmatprep.subr.bf16.mxu0 0
    %246 = vmatpush1.bf16.msra.mxu0 %v231
    %247 = vmatprep.subr.bf16.mxu0 0
    %248 = vmatpush1.bf16.msra.mxu0 %v232
    %249 = vmatprep.subr.bf16.mxu0 0
    %250 = vmatpush1.bf16.msra.mxu0 0
    %251 = vmatprep.subr.bf16.mxu0 0
    %252 = vmatpush1.bf16.msra.mxu0 0
    %253 = vmatprep.subr.bf16.mxu0 0
    %254 = vmatpush1.bf16.msra.mxu0 0
    %255 = vmatprep.subr.bf16.mxu0 0
    %256 = vmatpush1.bf16.msra.mxu0 0
    %257 = vmatprep.subr.bf16.mxu0 0
    %258 = vmatpush1.bf16.msra.mxu0 0
    %259 = vmatprep.subr.bf16.mxu0 0
    %260 = vmatpush1.bf16.msra.mxu0 0
    %261 = vmatprep.subr.bf16.mxu0 0
    %262 = vmatpush1.bf16.msra.mxu0 0
    %263 = vmatprep.subr.bf16.mxu0 0
    %264 = vmatpush1.bf16.msra.mxu0 0
    %265 = vmatprep.subr.bf16.mxu0 0
    %266 = vmatpush1.bf16.msra.mxu0 0
    %267 = vmatprep.subr.bf16.mxu0 0
    %268 = vmatpush1.bf16.msra.mxu0 0
    %269 = vmatprep.subr.bf16.mxu0 0
    %270 = vmatpush1.bf16.msra.mxu0 0
    %271 = vmatprep.subr.bf16.mxu0 0
    %272 = vmatpush1.bf16.msra.mxu0 0
    %273 = vmatprep.mubr.bf16.mxu0 0
    %274 = vmatmul.mubr.bf16.gmra.mrb[0].mxu0 %v239
    %v275 = vpop.f32.mrb[0].mxu0
    %v276 = vadd.f32 %v211, %v275
    %v277 = vpop.f32.mrb[0].mxu0
    %v278 = vpop.f32.mrb[0].mxu0
    %v279 = vpop.f32.mrb[0].mxu0
    %280 = vdwg.mxu0
    %281 = vst [vmem:[#allocation8] sm:$0xff] %v276
    // Predicated region
    $region42: #{decoder_forward.1} parent=1 // pred_check
      _
    $region43: #{decoder_forward.1} parent=1 // pred_check_branch
      %283 = sbr.rel (0) target = $region45
    $region44: #{decoder_forward.1} parent=1 // pred_region
      %s285 = ssub.s32 128, 128
      %286 = vsyncadd [#allocation4], %s285
      %s288 = sshll.u32 [#allocation8], 4
      %s289 = int_to_ptr.vmem [resolvable:$true] %s288
      %291 = dma.vmem_to_hbm [thread:$0]  %s289, 128, %s7, [#allocation4]
    $region45: #{decoder_forward.1} parent=1 // pred_fallthru
      _
    // Predicated region
    $region46: #{decoder_forward.1} parent=1 // pred_check
      _
    $region47: #{decoder_forward.1} parent=1 // pred_check_branch
      %293 = sbr.rel (0) target = $region49
    $region48: #{decoder_forward.1} parent=1 // pred_region
      %294 = dma.done [#allocation4], 128
    $region49: #{decoder_forward.1} parent=1 // pred_fallthru
      _
    %295 = vsyncpa [#allocation3], 1
    %296 = vsyncpa [#allocation6], 1
    %297 = vsyncpa [#allocation4], 1

</llo_original>
